<compile_context>
chip_gen: v6e
topology: v6e:2x2x1
jax: 0.10.0
libtpu: 0.0.40
codegen_flags: <defaults>
</compile_context>

<pallas_src>
import functools

import jax
import jax.numpy as jnp
from jax.experimental import pallas as pl
from jax.experimental.pallas import tpu as pltpu


def _round_up(n: int, m: int) -> int:
    return ((n + m - 1) // m) * m


# ---------------------------------------------------------------------------
# Kernel
# ---------------------------------------------------------------------------
def ppo_fused_kernel(x_ref, w1_ref, w23_ref, b_ref, out_ref, *, action_dim,
                     out_width):
    """One grid step processes a [TB, S] batch tile.

    x_ref   : [TB, S]       state tile (f32)
    w1_ref  : [S,  FW]      layer-1 weights, bf16 (actor | critic concatenated)
    w23_ref : [2, FW, FW]   block-diagonal fused layer-2 / layer-3 weights, bf16
    b_ref   : [3, FW]       packed biases (f32), one row per fused layer
    out_ref : [TB, OUT_W]   lanes [:A] = actor probs, lane A = critic value
    """
    x = x_ref[...].astype(jnp.bfloat16)
    b = b_ref[...]

    # layer 1: actor hidden in lanes [:H], critic hidden in lanes [H:2H]
    h = jnp.dot(x, w1_ref[...], preferred_element_type=jnp.float32) + b[0:1, :]
    h = jnp.maximum(h, 0.0)

    # layer 2: block-diagonal fused
    h = jnp.dot(h.astype(jnp.bfloat16), w23_ref[0],
                preferred_element_type=jnp.float32) + b[1:2, :]
    h = jnp.maximum(h, 0.0)

    # layer 3: lanes [:A] = actor logits, lane A = critic value, rest = 0
    z = jnp.dot(h.astype(jnp.bfloat16), w23_ref[1],
                preferred_element_type=jnp.float32) + b[2:3, :]

    # numerically stable softmax restricted to the actor lanes (f32)
    lane = jax.lax.broadcasted_iota(jnp.int32, z.shape, 1)
    is_logit = lane < action_dim
    logits = jnp.where(is_logit, z, -jnp.inf)
    m = jnp.max(logits, axis=-1, keepdims=True)
    e = jnp.exp(logits - m)                     # padded lanes -> exp(-inf) = 0
    denom = jnp.sum(e, axis=-1, keepdims=True)
    inv = pl.reciprocal(denom, approx=True)     # EUP vrcp (otherwise-idle slot)
    inv = inv * (2.0 - denom * inv)             # one Newton step -> ~f32 exact
    probs = e * inv                             # padded lanes stay exactly 0

    # pack: probs in lanes [:A], critic value in lane A; store only the narrow
    # [TB, OUT_W] slab (cuts HBM writeback ~8x vs a 128-wide slab)
    packed = jnp.where(lane == action_dim, z, probs)
    out_ref[...] = packed[:, :out_width].astype(out_ref.dtype)


# ---------------------------------------------------------------------------
# Wrapper: parameter packing + pallas_call
# ---------------------------------------------------------------------------
def pack_params(params, state_dim, action_dim, hidden_dim,
                weight_dtype=jnp.bfloat16):
    """Fuse actor+critic params into 3 lane-dense arrays (weights [in, out])."""
    S, A, H = state_dim, action_dim, hidden_dim
    FW = _round_up(max(2 * H, A + 1), 128)      # fused lane width

    w1 = jnp.zeros((S, FW), jnp.float32)
    w1 = w1.at[:, :H].set(params["aw1"]).at[:, H:2 * H].set(params["cw1"])

    w2 = jnp.zeros((FW, FW), jnp.float32)
    w2 = w2.at[:H, :H].set(params["aw2"]).at[H:2 * H, H:2 * H].set(params["cw2"])

    w3 = jnp.zeros((FW, FW), jnp.float32)
    w3 = w3.at[:H, :A].set(params["aw3"]).at[H:2 * H, A:A + 1].set(params["cw3"])

    b = jnp.zeros((3, FW), jnp.float32)
    b = b.at[0, :H].set(params["ab1"][0]).at[0, H:2 * H].set(params["cb1"][0])
    b = b.at[1, :H].set(params["ab2"][0]).at[1, H:2 * H].set(params["cb2"][0])
    b = b.at[2, :A].set(params["ab3"][0]).at[2, A:A + 1].set(params["cb3"][0])

    w23 = jnp.stack([w2, w3], axis=0)
    return w1.astype(weight_dtype), w23.astype(weight_dtype), b


@functools.partial(jax.jit, static_argnames=("action_dim", "block_b"))
def ppo_forward(x, w1, w23, b, *, action_dim, block_b=1024):
    """Returns (probs [B, A], value [B, 1])."""
    B, S = x.shape
    FW = w1.shape[1]
    OUT_W = _round_up(action_dim + 1, 8)        # narrow lane-packed output

    # Batch tile: big (amortize the ~0.35us/step grid overhead) but with at
    # least 2 grid steps when the batch allows it, so v7x's 2 TensorCores can
    # each take part of the "parallel" batch axis.  Always a multiple of 8
    # sublanes; the ragged last tile is handled by Pallas store masking (no
    # wrapper-side jnp.pad copy of x).
    TB = min(block_b, _round_up(B, 8))
    if B > 8:
        TB = min(TB, _round_up(pl.cdiv(B, 2), 8))
    TB = max(8, (TB // 8) * 8)
    grid = (pl.cdiv(B, TB),)

    kernel = functools.partial(ppo_fused_kernel, action_dim=action_dim,
                               out_width=OUT_W)
    out = pl.pallas_call(
        kernel,
        out_shape=jax.ShapeDtypeStruct((B, OUT_W), jnp.float32),
        grid_spec=pltpu.PrefetchScalarGridSpec(
            num_scalar_prefetch=0,
            grid=grid,
            in_specs=[
                pl.BlockSpec((TB, S), lambda i: (i, 0)),          # batch tile
                pl.BlockSpec((S, FW), lambda i: (0, 0)),          # VMEM-resident
                pl.BlockSpec((2, FW, FW), lambda i: (0, 0, 0)),   # VMEM-resident
                pl.BlockSpec((3, FW), lambda i: (0, 0)),          # VMEM-resident
            ],
            out_specs=pl.BlockSpec((TB, OUT_W), lambda i: (i, 0)),
        ),
        compiler_params=pltpu.CompilerParams(
            dimension_semantics=("parallel",),
        ),
    )(x, w1, w23, b)

    probs = out[:, :action_dim]
    value = out[:, action_dim:action_dim + 1]
    return probs, value


# ---------------------------------------------------------------------------
# Synthetic params + plain-JAX reference
# ---------------------------------------------------------------------------
def init_params(key, state_dim, action_dim, hidden_dim):
    """Deterministic synthetic parameters. Weights stored as [in, out]."""
    ks = jax.random.split(key, 12)

    def lin(kw, kb, fan_in, fan_out):
        scale = 1.0 / jnp.sqrt(fan_in)
        w = jax.random.uniform(kw, (fan_in, fan_out), jnp.float32, -scale, scale)
        bb = jax.random.uniform(kb, (1, fan_out), jnp.float32, -scale, scale)
        return w, bb

    aw1, ab1 = lin(ks[0], ks[1], state_dim, hidden_dim)
    aw2, ab2 = lin(ks[2], ks[3], hidden_dim, hidden_dim)
    aw3, ab3 = lin(ks[4], ks[5], hidden_dim, action_dim)
    cw1, cb1 = lin(ks[6], ks[7], state_dim, hidden_dim)
    cw2, cb2 = lin(ks[8], ks[9], hidden_dim, hidden_dim)
    cw3, cb3 = lin(ks[10], ks[11], hidden_dim, 1)

    return dict(aw1=aw1, ab1=ab1, aw2=aw2, ab2=ab2, aw3=aw3, ab3=ab3,
                cw1=cw1, cb1=cb1, cw2=cw2, cb2=cb2, cw3=cw3, cb3=cb3)


def reference_forward(x, p):
    h = jnp.maximum(x @ p["aw1"] + p["ab1"], 0.0)
    h = jnp.maximum(h @ p["aw2"] + p["ab2"], 0.0)
    logits = h @ p["aw3"] + p["ab3"]
    probs = jax.nn.softmax(logits, axis=-1)
    c = jnp.maximum(x @ p["cw1"] + p["cb1"], 0.0)
    c = jnp.maximum(c @ p["cw2"] + p["cb2"], 0.0)
    value = c @ p["cw3"] + p["cb3"]
    return probs, value


if __name__ == "__main__":
    # batch, state_dim, action_dim, hidden_dim (small demo; grid has 2 steps)
    B, S, A, H = 256, 16, 8, 32

    key = jax.random.PRNGKey(0)
    k_x, k_p = jax.random.split(key)
    x = jax.random.normal(k_x, (B, S), dtype=jnp.float32)
    params = init_params(k_p, S, A, H)
    w1, w23, b = pack_params(params, S, A, H)

    probs, value = ppo_forward(x, w1, w23, b, action_dim=A)
    jax.block_until_ready((probs, value))

    ref_probs, ref_value = reference_forward(x, params)
    assert probs.shape == (B, A) and value.shape == (B, 1)
    # bf16 MXU path -> relaxed tolerances vs. the f32 reference
    assert jnp.allclose(probs, ref_probs, atol=2e-2, rtol=2e-2)
    assert jnp.allclose(value, ref_value, atol=2e-2, rtol=2e-2)
    # normalization itself is done in f32, so it stays tight
    assert jnp.allclose(jnp.sum(probs, axis=-1), 1.0, atol=1e-4)

    print("KERNEL_OK")
</pallas_src>

<mosaic_0001>
module attributes {stable_mosaic.version = 11 : i64} {
  func.func @ppo_fused_kernel(%arg0: i32, %arg1: memref<128x16xf32, #tpu.memory_space<vmem>>, %arg2: memref<16x128xbf16, #tpu.memory_space<vmem>>, %arg3: memref<2x128x128xbf16, #tpu.memory_space<vmem>>, %arg4: memref<3x128xf32, #tpu.memory_space<vmem>>, %arg5: memref<128x16xf32, #tpu.memory_space<vmem>>) attributes {dimension_semantics = [#tpu.dimension_semantics<parallel>], iteration_bounds = array<i64: 2>, scalar_prefetch = 0 : i64, scratch_operands = 0 : i64, tpu.core_type = #tpu.core_type<tc>, window_params = [{transform_indices = @transform_0, window_bounds = array<i64: 128, 16>}, {pipeline_mode = #tpu.pipeline_mode<synchronous>, transform_indices = @transform_1, window_bounds = array<i64: 16, 128>}, {pipeline_mode = #tpu.pipeline_mode<synchronous>, transform_indices = @transform_2, window_bounds = array<i64: 2, 128, 128>}, {pipeline_mode = #tpu.pipeline_mode<synchronous>, transform_indices = @transform_3, window_bounds = array<i64: 3, 128>}, {transform_indices = @transform_4, window_bounds = array<i64: 128, 16>}]} {
    %c0 = arith.constant 0 : index
    %c0_0 = arith.constant 0 : index
    %0 = vector.load %arg1[%c0, %c0_0] : memref<128x16xf32, #tpu.memory_space<vmem>>, vector<128x16xf32>
    %1 = arith.truncf %0 : vector<128x16xf32> to vector<128x16xbf16>
    %c0_1 = arith.constant 0 : index
    %c0_2 = arith.constant 0 : index
    %2 = vector.load %arg4[%c0_1, %c0_2] : memref<3x128xf32, #tpu.memory_space<vmem>>, vector<3x128xf32>
    %c0_3 = arith.constant 0 : index
    %c0_4 = arith.constant 0 : index
    %3 = vector.load %arg2[%c0_3, %c0_4] : memref<16x128xbf16, #tpu.memory_space<vmem>>, vector<16x128xbf16>
    %cst = arith.constant dense<0.000000e+00> : vector<128x128xf32>
    %4 = tpu.matmul %1, %3, %cst {dimension_numbers = #tpu.dot_dimension_numbers<[1], [0], [0], [1], [0, 0, 1, 1], [], []>} : vector<128x16xbf16>, vector<16x128xbf16>, vector<128x128xf32> -> vector<128x128xf32>
    %5 = vector.extract_strided_slice %2 {offsets = [0, 0], sizes = [1, 128], strides = [1, 1]} : vector<3x128xf32> to vector<1x128xf32>
    %6 = vector.broadcast %5 : vector<1x128xf32> to vector<128x128xf32>
    %7 = arith.addf %4, %6 : vector<128x128xf32>
    %cst_5 = arith.constant 0.000000e+00 : f32
    %8 = vector.broadcast %cst_5 : f32 to vector<128x128xf32>
    %9 = arith.maximumf %7, %8 : vector<128x128xf32>
    %10 = arith.truncf %9 : vector<128x128xf32> to vector<128x128xbf16>
    %c0_6 = arith.constant 0 : index
    %c0_7 = arith.constant 0 : index
    %c0_8 = arith.constant 0 : index
    %11 = vector.load %arg3[%c0_6, %c0_7, %c0_8] : memref<2x128x128xbf16, #tpu.memory_space<vmem>>, vector<1x128x128xbf16>
    %12 = vector.shape_cast %11 : vector<1x128x128xbf16> to vector<128x128xbf16>
    %cst_9 = arith.constant dense<0.000000e+00> : vector<128x128xf32>
    %13 = tpu.matmul %10, %12, %cst_9 {dimension_numbers = #tpu.dot_dimension_numbers<[1], [0], [0], [1], [0, 0, 1, 1], [], []>} : vector<128x128xbf16>, vector<128x128xbf16>, vector<128x128xf32> -> vector<128x128xf32>
    %14 = vector.extract_strided_slice %2 {offsets = [1, 0], sizes = [1, 128], strides = [1, 1]} : vector<3x128xf32> to vector<1x128xf32>
    %15 = vector.broadcast %14 : vector<1x128xf32> to vector<128x128xf32>
    %16 = arith.addf %13, %15 : vector<128x128xf32>
    %cst_10 = arith.constant 0.000000e+00 : f32
    %17 = vector.broadcast %cst_10 : f32 to vector<128x128xf32>
    %18 = arith.maximumf %16, %17 : vector<128x128xf32>
    %19 = arith.truncf %18 : vector<128x128xf32> to vector<128x128xbf16>
    %c1 = arith.constant 1 : index
    %c0_11 = arith.constant 0 : index
    %c0_12 = arith.constant 0 : index
    %20 = vector.load %arg3[%c1, %c0_11, %c0_12] : memref<2x128x128xbf16, #tpu.memory_space<vmem>>, vector<1x128x128xbf16>
    %21 = vector.shape_cast %20 : vector<1x128x128xbf16> to vector<128x128xbf16>
    %cst_13 = arith.constant dense<0.000000e+00> : vector<128x128xf32>
    %22 = tpu.matmul %19, %21, %cst_13 {dimension_numbers = #tpu.dot_dimension_numbers<[1], [0], [0], [1], [0, 0, 1, 1], [], []>} : vector<128x128xbf16>, vector<128x128xbf16>, vector<128x128xf32> -> vector<128x128xf32>
    %23 = vector.extract_strided_slice %2 {offsets = [2, 0], sizes = [1, 128], strides = [1, 1]} : vector<3x128xf32> to vector<1x128xf32>
    %24 = vector.broadcast %23 : vector<1x128xf32> to vector<128x128xf32>
    %25 = arith.addf %22, %24 : vector<128x128xf32>
    %26 = tpu.iota {dimensions = array<i32: 1>} : vector<128x128xi32>
    %c8_i32 = arith.constant 8 : i32
    %27 = vector.broadcast %c8_i32 : i32 to vector<128x128xi32>
    %28 = arith.cmpi slt, %26, %27 : vector<128x128xi32>
    %cst_14 = arith.constant 0xFF800000 : f32
    %29 = vector.broadcast %cst_14 : f32 to vector<128x128xf32>
    %30 = arith.select %28, %25, %29 : vector<128x128xi1>, vector<128x128xf32>
    %cst_15 = arith.constant dense<0xFF800000> : vector<128xf32>
    %31 = vector.multi_reduction <maximumf>, %30, %cst_15 [1] : vector<128x128xf32> to vector<128xf32>
    %32 = vector.shape_cast %31 : vector<128xf32> to vector<128x1xf32>
    %33 = vector.broadcast %32 : vector<128x1xf32> to vector<128x128xf32>
    %34 = arith.subf %30, %33 : vector<128x128xf32>
    %35 = math.exp %34 : vector<128x128xf32>
    %cst_16 = arith.constant dense<0.000000e+00> : vector<128xf32>
    %36 = vector.multi_reduction <add>, %35, %cst_16 [1] : vector<128x128xf32> to vector<128xf32>
    %37 = vector.shape_cast %36 : vector<128xf32> to vector<128x1xf32>
    %38 = tpu.reciprocal %37 {approx = true} : vector<128x1xf32> -> vector<128x1xf32>
    %39 = arith.mulf %37, %38 : vector<128x1xf32>
    %cst_17 = arith.constant 2.000000e+00 : f32
    %40 = vector.broadcast %cst_17 : f32 to vector<128x1xf32>
    %41 = arith.subf %40, %39 : vector<128x1xf32>
    %42 = arith.mulf %38, %41 : vector<128x1xf32>
    %43 = vector.broadcast %42 : vector<128x1xf32> to vector<128x128xf32>
    %44 = arith.mulf %35, %43 : vector<128x128xf32>
    %c8_i32_18 = arith.constant 8 : i32
    %45 = vector.broadcast %c8_i32_18 : i32 to vector<128x128xi32>
    %46 = arith.cmpi eq, %26, %45 : vector<128x128xi32>
    %47 = arith.select %46, %25, %44 : vector<128x128xi1>, vector<128x128xf32>
    %48 = vector.extract_strided_slice %47 {offsets = [0, 0], sizes = [128, 16], strides = [1, 1]} : vector<128x128xf32> to vector<128x16xf32>
    %c0_19 = arith.constant 0 : index
    %c0_20 = arith.constant 0 : index
    %49 = vector.load %arg5[%c0_19, %c0_20] : memref<128x16xf32, #tpu.memory_space<vmem>>, vector<128x16xf32>
    tpu.vector_store %arg5[%c0_19, %c0_20], %48 {strides = array<i32>} : memref<128x16xf32, #tpu.memory_space<vmem>>, vector<128x16xf32>,
    return
  }
  func.func @transform_0(%arg0: i32) -> (i32, i32) {
    %c0_i32 = arith.constant 0 : i32
    %c0_i32_0 = arith.constant 0 : i32
    return %arg0, %c0_i32 : i32, i32
  }
  func.func @transform_1(%arg0: i32) -> (i32, i32) {
    %c0_i32 = arith.constant 0 : i32
    %c0_i32_0 = arith.constant 0 : i32
    %c0_i32_1 = arith.constant 0 : i32
    return %c0_i32, %c0_i32_0 : i32, i32
  }
  func.func @transform_2(%arg0: i32) -> (i32, i32, i32) {
    %c0_i32 = arith.constant 0 : i32
    %c0_i32_0 = arith.constant 0 : i32
    %c0_i32_1 = arith.constant 0 : i32
    %c0_i32_2 = arith.constant 0 : i32
    return %c0_i32, %c0_i32_0, %c0_i32_1 : i32, i32, i32
  }
  func.func @transform_3(%arg0: i32) -> (i32, i32) {
    %c0_i32 = arith.constant 0 : i32
    %c0_i32_0 = arith.constant 0 : i32
    %c0_i32_1 = arith.constant 0 : i32
    return %c0_i32, %c0_i32_0 : i32, i32
  }
  func.func @transform_4(%arg0: i32) -> (i32, i32) {
    %c0_i32 = arith.constant 0 : i32
    %c0_i32_0 = arith.constant 0 : i32
    return %arg0, %c0_i32 : i32, i32
  }
}

</mosaic_0001>

<llo_original>
// kernel: ppo_forward.1
$region0: #{ppo_forward.1}
  #allocation0 [shape = 'u32[]', space=smem, size = 0x4, offset = 0x4, fixed_abs, tag = 'smem constant byte address 0x4 - core index']
  #allocation1 [shape = 'u32[144,128]{1,0:T(1,128)}', space=vmem, size = 0x12000, scoped, tag = 'internal scratch']
  %s0 = inlined_call_operand.vmem [shape: f32[256,16], index: 0, kind: input, shape index: {}]
  %s1 = inlined_call_operand.vmem [shape: bf16[16,128], index: 1, kind: input, shape index: {}]
  %s2 = inlined_call_operand.vmem [shape: bf16[2,128,128], index: 2, kind: input, shape index: {}]
  %s3 = inlined_call_operand.vmem [shape: f32[3,128], index: 3, kind: input, shape index: {}]
  %s4 = inlined_call_operand.vmem [shape: f32[256,16], index: 4, kind: output, shape index: {}]
  %s5 = sld [smem:[#allocation0]]
  $region49: #{ppo_forward.1} parent=0
    _
  %s7 = ssub.s32 1, %s5
  %s8 = scalar_select 0, %s7, %s5
  loop: start=0, step=1, limit=4
  $region2: #{ppo_forward.1} parent=0 // loop_pre_header
    _
  $region3: #{ppo_forward.1} parent=0 // loop_header
    %s10 = sphi 0, %s14
    %p11 = scmp.ge.s32.totalorder %s10, 4
    %s20 = sphi 0, %s22
    %s23 = sphi 0, %s20
    %s24 = sphi 0, %s23
    %s40 = sphi 0, %s24
    %s44 = sphi 0, %s44
    %s46 = sphi 0, %s44
    %s47 = sphi 0, %s46
    %s61 = sphi 0, %s47
    %s65 = sphi 0, %s65
    %s67 = sphi 0, %s65
    %s68 = sphi 0, %s67
    %s82 = sphi 0, %s68
    %s86 = sphi 0, %s86
    %s88 = sphi 0, %s86
    %s89 = sphi 0, %s88
    %s103 = sphi 0, %s89
    %s109 = sphi 0, %s111
    %s112 = sphi 0, %s109
    %s113 = sphi 0, %s112
    %s129 = sphi 0, %s113
  $region4: #{ppo_forward.1} parent=0 // loop_header_branch
    %13 = sbr.rel (%p11) target = $region8
  $region5: #{ppo_forward.1} parent=0 // loop_body
    %s15 = ssub.s32 %s10, 1
    %s16 = ssub.s32 %s10, 2
    %s17 = sadd.s32 %s10, 1
    %s18 = ssub.s32 %s10, %s17
    %p19 = scmp.eq.s32.totalorder %s18, 0
    %s21 = sadd.s32 %s20, 1
    %s22 = scalar_select %p19, %s20, %s21
    %p25 = pneg %p19
    %p26 = scmp.eq.s32.totalorder %s10, 1
    %p27 = por %p25, %p26
    %p28 = scmp.ne.s32.totalorder %s20, %s23
    %p29 = scmp.eq.s32.totalorder %s10, 0
    %p30 = por %p28, %p29
    %p31 = scmp.ne.s32.totalorder %s20, %s23
    %p32 = scmp.eq.s32.totalorder %s15, 1
    %p33 = por %p31, %p32
    %p34 = scmp.ne.s32.totalorder %s23, %s24
    %p35 = scmp.eq.s32.totalorder %s15, 0
    %p36 = por %p34, %p35
    %p37 = scmp.ne.s32.totalorder %s23, %s24
    %p38 = scmp.eq.s32.totalorder %s16, 1
    %p39 = por %p37, %p38
    %p41 = scmp.ne.s32.totalorder %s24, %s40
    %p42 = scmp.eq.s32.totalorder %s16, 0
    %p43 = por %p41, %p42
    %s45 = sadd.s32 %s44, 1
    %p48 = scmp.eq.s32.totalorder %s10, 1
    %p49 = scmp.ne.s32.totalorder %s44, %s46
    %p50 = scmp.eq.s32.totalorder %s10, 0
    %p51 = por %p49, %p50
    %p52 = scmp.ne.s32.totalorder %s44, %s46
    %p53 = scmp.eq.s32.totalorder %s15, 1
    %p54 = por %p52, %p53
    %p55 = scmp.ne.s32.totalorder %s46, %s47
    %p56 = scmp.eq.s32.totalorder %s15, 0
    %p57 = por %p55, %p56
    %p58 = scmp.ne.s32.totalorder %s46, %s47
    %p59 = scmp.eq.s32.totalorder %s16, 1
    %p60 = por %p58, %p59
    %p62 = scmp.ne.s32.totalorder %s47, %s61
    %p63 = scmp.eq.s32.totalorder %s16, 0
    %p64 = por %p62, %p63
    %s66 = sadd.s32 %s65, 1
    %p69 = scmp.eq.s32.totalorder %s10, 1
    %p70 = scmp.ne.s32.totalorder %s65, %s67
    %p71 = scmp.eq.s32.totalorder %s10, 0
    %p72 = por %p70, %p71
    %p73 = scmp.ne.s32.totalorder %s65, %s67
    %p74 = scmp.eq.s32.totalorder %s15, 1
    %p75 = por %p73, %p74
    %p76 = scmp.ne.s32.totalorder %s67, %s68
    %p77 = scmp.eq.s32.totalorder %s15, 0
    %p78 = por %p76, %p77
    %p79 = scmp.ne.s32.totalorder %s67, %s68
    %p80 = scmp.eq.s32.totalorder %s16, 1
    %p81 = por %p79, %p80
    %p83 = scmp.ne.s32.totalorder %s68, %s82
    %p84 = scmp.eq.s32.totalorder %s16, 0
    %p85 = por %p83, %p84
    %s87 = sadd.s32 %s86, 1
    %p90 = scmp.eq.s32.totalorder %s10, 1
    %p91 = scmp.ne.s32.totalorder %s86, %s88
    %p92 = scmp.eq.s32.totalorder %s10, 0
    %p93 = por %p91, %p92
    %p94 = scmp.ne.s32.totalorder %s86, %s88
    %p95 = scmp.eq.s32.totalorder %s15, 1
    %p96 = por %p94, %p95
    %p97 = scmp.ne.s32.totalorder %s88, %s89
    %p98 = scmp.eq.s32.totalorder %s15, 0
    %p99 = por %p97, %p98
    %p100 = scmp.ne.s32.totalorder %s88, %s89
    %p101 = scmp.eq.s32.totalorder %s16, 1
    %p102 = por %p100, %p101
    %p104 = scmp.ne.s32.totalorder %s89, %s103
    %p105 = scmp.eq.s32.totalorder %s16, 0
    %p106 = por %p104, %p105
    %s107 = ssub.s32 %s10, %s17
    %p108 = scmp.eq.s32.totalorder %s107, 0
    %s110 = sadd.s32 %s109, 1
    %s111 = scalar_select %p108, %s109, %s110
    %p114 = pneg %p108
    %p115 = scmp.eq.s32.totalorder %s10, 1
    %p116 = por %p114, %p115
    %p117 = scmp.ne.s32.totalorder %s109, %s112
    %p118 = scmp.eq.s32.totalorder %s10, 0
    %p119 = por %p117, %p118
    %p120 = scmp.ne.s32.totalorder %s109, %s112
    %p121 = scmp.eq.s32.totalorder %s15, 1
    %p122 = por %p120, %p121
    %p123 = scmp.ne.s32.totalorder %s112, %s113
    %p124 = scmp.eq.s32.totalorder %s15, 0
    %p125 = por %p123, %p124
    %p126 = scmp.ne.s32.totalorder %s112, %s113
    %p127 = scmp.eq.s32.totalorder %s16, 1
    %p128 = por %p126, %p127
    %p130 = scmp.ne.s32.totalorder %s113, %s129
    %p131 = scmp.eq.s32.totalorder %s16, 0
    %p132 = por %p130, %p131
    %p133 = scmp.le.s32.totalorder 1, %s10
    %p134 = scmp.lt.s32.totalorder %s10, 3
    %p135 = pnand %p133, %p134
    %p136 = pneg %p135
    // Predicated region
    $region9: #{ppo_forward.1} parent=5 // pred_check
      _
    $region10: #{ppo_forward.1} parent=5 // pred_check_branch
      %138 = sbr.rel (%p135) target = $region12
    $region11: #{ppo_forward.1} parent=5 // pred_region
      %s139 = ssub.s32 %s10, 1
      // Predicated region
      $region13: #{ppo_forward.1} parent=11 // pred_check
        %p140 = pneg %p57
      $region14: #{ppo_forward.1} parent=11 // pred_check_branch
        %142 = sbr.rel (%p140) target = $region16
      $region15: #{ppo_forward.1} parent=11 // pred_region
        _
      $region16: #{ppo_forward.1} parent=11 // pred_fallthru
        _
      // Predicated region
      $region17: #{ppo_forward.1} parent=11 // pred_check
        %p143 = pneg %p78
      $region18: #{ppo_forward.1} parent=11 // pred_check_branch
        %145 = sbr.rel (%p143) target = $region20
      $region19: #{ppo_forward.1} parent=11 // pred_region
        _
      $region20: #{ppo_forward.1} parent=11 // pred_fallthru
        _
      // Predicated region
      $region21: #{ppo_forward.1} parent=11 // pred_check
        %p146 = pneg %p99
      $region22: #{ppo_forward.1} parent=11 // pred_check_branch
        %148 = sbr.rel (%p146) target = $region24
      $region23: #{ppo_forward.1} parent=11 // pred_region
        _
      $region24: #{ppo_forward.1} parent=11 // pred_fallthru
        _
    $region12: #{ppo_forward.1} parent=5 // pred_fallthru
      _
    %p149 = scmp.lt.s32.totalorder %s10, 2
    // Predicated region
    $region25: #{ppo_forward.1} parent=5 // pred_check
      %p150 = pneg %p149
    $region26: #{ppo_forward.1} parent=5 // pred_check_branch
      %152 = sbr.rel (%p150) target = $region28
    $region27: #{ppo_forward.1} parent=5 // pred_region
      // Predicated region
      $region29: #{ppo_forward.1} parent=27 // pred_check
        %p153 = pneg %p30
      $region30: #{ppo_forward.1} parent=27 // pred_check_branch
        %155 = sbr.rel (%p153) target = $region32
      $region31: #{ppo_forward.1} parent=27 // pred_region
        %s156 = smul.u32 16, %s10
        %p157 = scmp.lt.s32.totalorder %s156, 31
        %s158 = scalar_select %p157, %s156, 31
        %s159 = smul.addr %s158, 8
        %s160 = scalar_lea.vmem %s0, %s159
        %s161 = smul.u32 16, %s10
      $region32: #{ppo_forward.1} parent=27 // pred_fallthru
        _
    $region28: #{ppo_forward.1} parent=5 // pred_fallthru
      _
    %p162 = scmp.le.s32.totalorder 1, %s10
    %p163 = scmp.lt.s32.totalorder %s10, 3
    %p164 = pnand %p162, %p163
    %p165 = pneg %p164
    // Predicated region
    $region33: #{ppo_forward.1} parent=5 // pred_check
      _
    $region34: #{ppo_forward.1} parent=5 // pred_check_branch
      %167 = sbr.rel (%p164) target = $region36
    $region35: #{ppo_forward.1} parent=5 // pred_region
      %s168 = ssub.s32 %s10, 1
      %s169 = smul.u32 16, %s15
      %p170 = scmp.lt.s32.totalorder %s169, 31
      %s171 = scalar_select %p170, %s169, 31
      %s172 = smul.addr %s171, 8
      %s173 = scalar_lea.vmem %s0, %s172
      %p174 = pneg %p36
      %p175 = pneg %p33
      %p176 = pneg %p57
      %p177 = pneg %p54
      %p178 = pneg %p78
      %p179 = pneg %p75
      %p180 = pneg %p99
      %p181 = pneg %p96
      %p182 = pneg %p125
      %p183 = pneg %p122
      %s184 = smul.u32 16, %s15
      %p185 = scmp.lt.s32.totalorder %s184, 31
      %s186 = scalar_select %p185, %s184, 31
      %s187 = smul.addr %s186, 8
      %s188 = scalar_lea.vmem %s4, %s187
      %s189 = smul.u32 16, %s15
      %p190 = scmp.lt.s32.totalorder %s189, 31
      %s191 = scalar_select %p190, %s189, 31
      %s192 = smul.addr %s191, 8
      %s193 = scalar_lea.vmem %s0, %s192
      %s194 = smul.u32 16, %s15
      %s195 = smul.u32 16, %s15
      %p196 = scmp.lt.s32.totalorder %s195, 31
      %s197 = scalar_select %p196, %s195, 31
      %s198 = smul.addr %s197, 8
      %s199 = scalar_lea.vmem %s4, %s198
      %s200 = smul.u32 16, %s15
      %v202 = vld [vmem:[%s193] sm:$0xff]
      %v203 = vld [vmem:[%s193 + $0x8] sm:$0xff]
      %v204 = vld [vmem:[%s193 + $0x10] sm:$0xff]
      %v205 = vld [vmem:[%s193 + $0x18] sm:$0xff]
      %v206 = vld [vmem:[%s193 + $0x20] sm:$0xff]
      %v207 = vld [vmem:[%s193 + $0x28] sm:$0xff]
      %v208 = vld [vmem:[%s193 + $0x30] sm:$0xff]
      %v209 = vld [vmem:[%s193 + $0x38] sm:$0xff]
      %v210 = vld [vmem:[%s193 + $0x40] sm:$0xff]
      %v211 = vld [vmem:[%s193 + $0x48] sm:$0xff]
      %v212 = vld [vmem:[%s193 + $0x50] sm:$0xff]
      %v213 = vld [vmem:[%s193 + $0x58] sm:$0xff]
      %v214 = vld [vmem:[%s193 + $0x60] sm:$0xff]
      %v215 = vld [vmem:[%s193 + $0x68] sm:$0xff]
      %v216 = vld [vmem:[%s193 + $0x70] sm:$0xff]
      %v217 = vld [vmem:[%s193 + $0x78] sm:$0xff]
      %v218 = vpack.c.bf16 %v203, %v202
      %v219 = vpack.c.bf16 %v205, %v204
      %v220 = vpack.c.bf16 %v207, %v206
      %v221 = vpack.c.bf16 %v209, %v208
      %v222 = vpack.c.bf16 %v211, %v210
      %v223 = vpack.c.bf16 %v213, %v212
      %v224 = vpack.c.bf16 %v215, %v214
      %v225 = vpack.c.bf16 %v217, %v216
      %v226 = vld [vmem:[%s3] sm:$0x7]
      %v227 = vld [vmem:[%s1] sm:$0xf]
      %v228 = vld [vmem:[%s1 + $0x4] sm:$0xf]
      %v229 = vlaneseq
      %v230 = vshrl.u32 %v229, 7
      %v231 = vsub.s32 0, %v230
      %v232 = vrot.slane %v226, %v231
      %v235 = vunpack.c.l.b16 %v227
      %v236 = vunpack.c.l.b16 %v228
      %v237 = vpack.c.b16 %v236, %v235
      %vm239 = vcmask 130048
      %v241 = vsel %vm239, %v218, 0
      %v244 = vsel %vm239, %v219, 0
      %v247 = vsel %vm239, %v220, 0
      %v250 = vsel %vm239, %v221, 0
      %v253 = vsel %vm239, %v222, 0
      %v256 = vsel %vm239, %v223, 0
      %v259 = vsel %vm239, %v224, 0
      %v262 = vsel %vm239, %v225, 0
      %264 = vmatprep.subr.bf16.mxu0 0
      %265 = vmatpush1.bf16.msra.mxu0 0
      %266 = vmatprep.subr.bf16.mxu0 0
      %267 = vmatpush1.bf16.msra.mxu0 0
      %268 = vmatprep.subr.bf16.mxu0 0
      %269 = vmatpush1.bf16.msra.mxu0 0
      %270 = vmatprep.subr.bf16.mxu0 0
      %271 = vmatpush1.bf16.msra.mxu0 0
      %272 = vmatprep.subr.bf16.mxu0 0
      %273 = vmatpush1.bf16.msra.mxu0 0
      %274 = vmatprep.subr.bf16.mxu0 0
      %275 = vmatpush1.bf16.msra.mxu0 0
      %276 = vmatprep.subr.bf16.mxu0 0
      %277 = vmatpush1.bf16.msra.mxu0 0
      %278 = vmatprep.subr.bf16.mxu0 0
      %279 = vmatpush1.bf16.msra.mxu0 %v237
      %280 = vmatprep.subr.bf16.mxu0 0
      %281 = vmatpush2.bf16.msra.mxu0 0
      %282 = vmatprep.subr.bf16.mxu0 0
      %283 = vmatpush2.bf16.msra.mxu0 0
      %284 = vmatprep.subr.bf16.mxu0 0
      %285 = vmatpush2.bf16.msra.mxu0 0
      %286 = vmatprep.subr.bf16.mxu0 0
      %287 = vmatpush2.bf16.msra.mxu0 0
      %288 = vmatprep.subr.bf16.mxu0 0
      %289 = vmatpush2.bf16.msra.mxu0 0
      %290 = vmatprep.subr.bf16.mxu0 0
      %291 = vmatpush2.bf16.msra.mxu0 0
      %292 = vmatprep.subr.bf16.mxu0 0
      %293 = vmatpush2.bf16.msra.mxu0 0
      %294 = vmatprep.subr.bf16.mxu0 0
      %295 = vmatpush2.bf16.msra.mxu0 0
      %296 = vmatprep.mubr.bf16.mxu0 0
      %297 = vmatmul.mubr.bf16.gmra.mxu0 %v241
      %v298 = vpop.f32.mrf.mxu0
      %v299 = vadd.f32 %v232, %v298
      %v300 = vpop.f32.mrf.mxu0
      %v301 = vpop.f32.mrf.mxu0
      %v302 = vadd.f32 %v232, %v301
      %v303 = vpop.f32.mrf.mxu0
      %304 = vmatprep.mubr.bf16.mxu0 0
      %305 = vmatmul.mubr.bf16.gmra.mxu0 %v244
      %v306 = vpop.f32.mrf.mxu0
      %v307 = vadd.f32 %v232, %v306
      %v308 = vpop.f32.mrf.mxu0
      %v309 = vpop.f32.mrf.mxu0
      %v310 = vadd.f32 %v232, %v309
      %v311 = vpop.f32.mrf.mxu0
      %312 = vmatprep.mubr.bf16.mxu0 0
      %313 = vmatmul.mubr.bf16.gmra.mxu0 %v247
      %v314 = vpop.f32.mrf.mxu0
      %v315 = vadd.f32 %v232, %v314
      %v316 = vpop.f32.mrf.mxu0
      %v317 = vpop.f32.mrf.mxu0
      %v318 = vadd.f32 %v232, %v317
      %v319 = vpop.f32.mrf.mxu0
      %320 = vmatprep.mubr.bf16.mxu0 0
      %321 = vmatmul.mubr.bf16.gmra.mxu0 %v250
      %v322 = vpop.f32.mrf.mxu0
      %v323 = vadd.f32 %v232, %v322
      %v324 = vpop.f32.mrf.mxu0
      %v325 = vpop.f32.mrf.mxu0
      %v326 = vadd.f32 %v232, %v325
      %v327 = vpop.f32.mrf.mxu0
      %328 = vmatprep.mubr.bf16.mxu0 0
      %329 = vmatmul.mubr.bf16.gmra.mxu0 %v253
      %v330 = vpop.f32.mrf.mxu0
      %v331 = vadd.f32 %v232, %v330
      %v332 = vpop.f32.mrf.mxu0
      %v333 = vpop.f32.mrf.mxu0
      %v334 = vadd.f32 %v232, %v333
      %v335 = vpop.f32.mrf.mxu0
      %336 = vmatprep.mubr.bf16.mxu0 0
      %337 = vmatmul.mubr.bf16.gmra.mxu0 %v256
      %v338 = vpop.f32.mrf.mxu0
      %v339 = vadd.f32 %v232, %v338
      %v340 = vpop.f32.mrf.mxu0
      %v341 = vpop.f32.mrf.mxu0
      %v342 = vadd.f32 %v232, %v341
      %v343 = vpop.f32.mrf.mxu0
      %344 = vmatprep.mubr.bf16.mxu0 0
      %345 = vmatmul.mubr.bf16.gmra.mxu0 %v259
      %v346 = vpop.f32.mrf.mxu0
      %v347 = vadd.f32 %v232, %v346
      %v348 = vpop.f32.mrf.mxu0
      %v349 = vpop.f32.mrf.mxu0
      %v350 = vadd.f32 %v232, %v349
      %v351 = vpop.f32.mrf.mxu0
      %352 = vmatprep.mubr.bf16.mxu0 0
      %353 = vmatmul.mubr.bf16.gmra.mxu0 %v262
      %v354 = vpop.f32.mrf.mxu0
      %v355 = vadd.f32 %v232, %v354
      %v356 = vpop.f32.mrf.mxu0
      %v357 = vpop.f32.mrf.mxu0
      %v358 = vadd.f32 %v232, %v357
      %v359 = vpop.f32.mrf.mxu0
      %360 = vdwg.mxu0
      %v361 = vmax.f32 %v299, 0.0
      %v362 = vmax.f32 %v302, 0.0
      %v363 = vmax.f32 %v307, 0.0
      %v364 = vmax.f32 %v310, 0.0
      %v365 = vmax.f32 %v315, 0.0
      %v366 = vmax.f32 %v318, 0.0
      %v367 = vmax.f32 %v323, 0.0
      %v368 = vmax.f32 %v326, 0.0
      %v369 = vmax.f32 %v331, 0.0
      %v370 = vmax.f32 %v334, 0.0
      %v371 = vmax.f32 %v339, 0.0
      %v372 = vmax.f32 %v342, 0.0
      %v373 = vmax.f32 %v347, 0.0
      %v374 = vmax.f32 %v350, 0.0
      %v375 = vmax.f32 %v355, 0.0
      %v376 = vmax.f32 %v358, 0.0
      %v377 = vpack.c.bf16 %v362, %v361
      %v378 = vpack.c.bf16 %v364, %v363
      %v379 = vpack.c.bf16 %v366, %v365
      %v380 = vpack.c.bf16 %v368, %v367
      %v381 = vpack.c.bf16 %v370, %v369
      %v382 = vpack.c.bf16 %v372, %v371
      %v383 = vpack.c.bf16 %v374, %v373
      %v384 = vpack.c.bf16 %v376, %v375
      %v385 = vld [vmem:[%s2] sm:$0xf]
      %v386 = vld [vmem:[%s2 + $0x4] sm:$0xf]
      %v387 = vld [vmem:[%s2 + $0x8] sm:$0xf]
      %v388 = vld [vmem:[%s2 + $0xc] sm:$0xf]
      %v389 = vld [vmem:[%s2 + $0x10] sm:$0xf]
      %v390 = vld [vmem:[%s2 + $0x14] sm:$0xf]
      %v391 = vld [vmem:[%s2 + $0x18] sm:$0xf]
      %v392 = vld [vmem:[%s2 + $0x1c] sm:$0xf]
      %v393 = vld [vmem:[%s2 + $0x20] sm:$0xf]
      %v394 = vld [vmem:[%s2 + $0x24] sm:$0xf]
      %v395 = vld [vmem:[%s2 + $0x28] sm:$0xf]
      %v396 = vld [vmem:[%s2 + $0x2c] sm:$0xf]
      %v397 = vld [vmem:[%s2 + $0x30] sm:$0xf]
      %v398 = vld [vmem:[%s2 + $0x34] sm:$0xf]
      %v399 = vld [vmem:[%s2 + $0x38] sm:$0xf]
      %v400 = vld [vmem:[%s2 + $0x3c] sm:$0xf]
      %v401 = vlaneseq
      %v402 = vshrl.u32 %v401, 7
      %v403 = vsub.s32 1, %v402
      %v404 = vrot.slane %v226, %v403
      %v421 = vunpack.c.l.b16 %v385
      %v422 = vunpack.c.l.b16 %v386
      %v423 = vunpack.c.l.b16 %v387
      %v424 = vunpack.c.l.b16 %v388
      %v425 = vunpack.c.l.b16 %v389
      %v426 = vunpack.c.l.b16 %v390
      %v427 = vunpack.c.l.b16 %v391
      %v428 = vunpack.c.l.b16 %v392
      %v429 = vunpack.c.l.b16 %v393
      %v430 = vunpack.c.l.b16 %v394
      %v431 = vunpack.c.l.b16 %v395
      %v432 = vunpack.c.l.b16 %v396
      %v433 = vunpack.c.l.b16 %v397
      %v434 = vunpack.c.l.b16 %v398
      %v435 = vunpack.c.l.b16 %v399
      %v436 = vunpack.c.l.b16 %v400
      %v437 = vpack.c.b16 %v422, %v421
      %v438 = vpack.c.b16 %v424, %v423
      %v439 = vpack.c.b16 %v426, %v425
      %v440 = vpack.c.b16 %v428, %v427
      %v441 = vpack.c.b16 %v430, %v429
      %v442 = vpack.c.b16 %v432, %v431
      %v443 = vpack.c.b16 %v434, %v433
      %v444 = vpack.c.b16 %v436, %v435
      %453 = vmatprep.subr.bf16.mxu0 0
      %454 = vmatpush1.bf16.msra.mxu0 %v444
      %455 = vmatprep.subr.bf16.mxu0 0
      %456 = vmatpush1.bf16.msra.mxu0 %v443
      %457 = vmatprep.subr.bf16.mxu0 0
      %458 = vmatpush1.bf16.msra.mxu0 %v442
      %459 = vmatprep.subr.bf16.mxu0 0
      %460 = vmatpush1.bf16.msra.mxu0 %v441
      %461 = vmatprep.subr.bf16.mxu0 0
      %462 = vmatpush1.bf16.msra.mxu0 %v440
      %463 = vmatprep.subr.bf16.mxu0 0
      %464 = vmatpush1.bf16.msra.mxu0 %v439
      %465 = vmatprep.subr.bf16.mxu0 0
      %466 = vmatpush1.bf16.msra.mxu0 %v438
      %467 = vmatprep.subr.bf16.mxu0 0
      %468 = vmatpush1.bf16.msra.mxu0 %v437
      %469 = vmatprep.subr.bf16.mxu0 0
      %470 = vmatpush2.bf16.msra.mxu0 0
      %471 = vmatprep.subr.bf16.mxu0 0
      %472 = vmatpush2.bf16.msra.mxu0 0
      %473 = vmatprep.subr.bf16.mxu0 0
      %474 = vmatpush2.bf16.msra.mxu0 0
      %475 = vmatprep.subr.bf16.mxu0 0
      %476 = vmatpush2.bf16.msra.mxu0 0
      %477 = vmatprep.subr.bf16.mxu0 0
      %478 = vmatpush2.bf16.msra.mxu0 0
      %479 = vmatprep.subr.bf16.mxu0 0
      %480 = vmatpush2.bf16.msra.mxu0 0
      %481 = vmatprep.subr.bf16.mxu0 0
      %482 = vmatpush2.bf16.msra.mxu0 0
      %483 = vmatprep.subr.bf16.mxu0 0
      %484 = vmatpush2.bf16.msra.mxu0 0
      %485 = vmatprep.mubr.bf16.mxu0 0
      %486 = vmatmul.mubr.bf16.gmra.mxu0 %v377
      %v487 = vpop.f32.mrf.mxu0
      %v488 = vadd.f32 %v404, %v487
      %v489 = vpop.f32.mrf.mxu0
      %v490 = vpop.f32.mrf.mxu0
      %v491 = vadd.f32 %v404, %v490
      %v492 = vpop.f32.mrf.mxu0
      %493 = vmatprep.mubr.bf16.mxu0 0
      %494 = vmatmul.mubr.bf16.gmra.mxu0 %v378
      %v495 = vpop.f32.mrf.mxu0
      %v496 = vadd.f32 %v404, %v495
      %v497 = vpop.f32.mrf.mxu0
      %v498 = vpop.f32.mrf.mxu0
      %v499 = vadd.f32 %v404, %v498
      %v500 = vpop.f32.mrf.mxu0
      %501 = vmatprep.mubr.bf16.mxu0 0
      %502 = vmatmul.mubr.bf16.gmra.mxu0 %v379
      %v503 = vpop.f32.mrf.mxu0
      %v504 = vadd.f32 %v404, %v503
      %v505 = vpop.f32.mrf.mxu0
      %v506 = vpop.f32.mrf.mxu0
      %v507 = vadd.f32 %v404, %v506
      %v508 = vpop.f32.mrf.mxu0
      %509 = vmatprep.mubr.bf16.mxu0 0
      %510 = vmatmul.mubr.bf16.gmra.mxu0 %v380
      %v511 = vpop.f32.mrf.mxu0
      %v512 = vadd.f32 %v404, %v511
      %v513 = vpop.f32.mrf.mxu0
      %v514 = vpop.f32.mrf.mxu0
      %v515 = vadd.f32 %v404, %v514
      %v516 = vpop.f32.mrf.mxu0
      %517 = vmatprep.mubr.bf16.mxu0 0
      %518 = vmatmul.mubr.bf16.gmra.mxu0 %v381
      %v519 = vpop.f32.mrf.mxu0
      %v520 = vadd.f32 %v404, %v519
      %v521 = vpop.f32.mrf.mxu0
      %v522 = vpop.f32.mrf.mxu0
      %v523 = vadd.f32 %v404, %v522
      %v524 = vpop.f32.mrf.mxu0
      %525 = vmatprep.mubr.bf16.mxu0 0
      %526 = vmatmul.mubr.bf16.gmra.mxu0 %v382
      %v527 = vpop.f32.mrf.mxu0
      %v528 = vadd.f32 %v404, %v527
      %v529 = vpop.f32.mrf.mxu0
      %v530 = vpop.f32.mrf.mxu0
      %v531 = vadd.f32 %v404, %v530
      %v532 = vpop.f32.mrf.mxu0
      %533 = vmatprep.mubr.bf16.mxu0 0
      %534 = vmatmul.mubr.bf16.gmra.mxu0 %v383
      %v535 = vpop.f32.mrf.mxu0
      %v536 = vadd.f32 %v404, %v535
      %v537 = vpop.f32.mrf.mxu0
      %v538 = vpop.f32.mrf.mxu0
      %v539 = vadd.f32 %v404, %v538
      %v540 = vpop.f32.mrf.mxu0
      %541 = vmatprep.mubr.bf16.mxu0 0
      %542 = vmatmul.mubr.bf16.gmra.mxu0 %v384
      %v543 = vpop.f32.mrf.mxu0
      %v544 = vadd.f32 %v404, %v543
      %v545 = vpop.f32.mrf.mxu0
      %v546 = vpop.f32.mrf.mxu0
      %v547 = vadd.f32 %v404, %v546
      %v548 = vpop.f32.mrf.mxu0
      %549 = vdwg.mxu0
      %v550 = vmax.f32 %v488, 0.0
      %v551 = vmax.f32 %v491, 0.0
      %v552 = vmax.f32 %v496, 0.0
      %v553 = vmax.f32 %v499, 0.0
      %v554 = vmax.f32 %v504, 0.0
      %v555 = vmax.f32 %v507, 0.0
      %v556 = vmax.f32 %v512, 0.0
      %v557 = vmax.f32 %v515, 0.0
      %v558 = vmax.f32 %v520, 0.0
      %v559 = vmax.f32 %v523, 0.0
      %v560 = vmax.f32 %v528, 0.0
      %v561 = vmax.f32 %v531, 0.0
      %v562 = vmax.f32 %v536, 0.0
      %v563 = vmax.f32 %v539, 0.0
      %v564 = vmax.f32 %v544, 0.0
      %v565 = vmax.f32 %v547, 0.0
      %v566 = vpack.c.bf16 %v551, %v550
      %v567 = vpack.c.bf16 %v553, %v552
      %v568 = vpack.c.bf16 %v555, %v554
      %v569 = vpack.c.bf16 %v557, %v556
      %v570 = vpack.c.bf16 %v559, %v558
      %v571 = vpack.c.bf16 %v561, %v560
      %v572 = vpack.c.bf16 %v563, %v562
      %v573 = vpack.c.bf16 %v565, %v564
      %s574 = scalar_lea.vmem %s2, 64
      %v575 = vld [vmem:[%s574] sm:$0xf]
      %v576 = vld [vmem:[%s574 + $0x4] sm:$0xf]
      %v577 = vld [vmem:[%s574 + $0x8] sm:$0xf]
      %v578 = vld [vmem:[%s574 + $0xc] sm:$0xf]
      %v579 = vld [vmem:[%s574 + $0x10] sm:$0xf]
      %v580 = vld [vmem:[%s574 + $0x14] sm:$0xf]
      %v581 = vld [vmem:[%s574 + $0x18] sm:$0xf]
      %v582 = vld [vmem:[%s574 + $0x1c] sm:$0xf]
      %v583 = vld [vmem:[%s574 + $0x20] sm:$0xf]
      %v584 = vld [vmem:[%s574 + $0x24] sm:$0xf]
      %v585 = vld [vmem:[%s574 + $0x28] sm:$0xf]
      %v586 = vld [vmem:[%s574 + $0x2c] sm:$0xf]
      %v587 = vld [vmem:[%s574 + $0x30] sm:$0xf]
      %v588 = vld [vmem:[%s574 + $0x34] sm:$0xf]
      %v589 = vld [vmem:[%s574 + $0x38] sm:$0xf]
      %v590 = vld [vmem:[%s574 + $0x3c] sm:$0xf]
      %v591 = vlaneseq
      %v592 = vshrl.u32 %v591, 7
      %v593 = vsub.s32 2, %v592
      %v594 = vrot.slane %v226, %v593
      %v611 = vunpack.c.l.b16 %v575
      %v612 = vunpack.c.l.b16 %v576
      %v613 = vunpack.c.l.b16 %v577
      %v614 = vunpack.c.l.b16 %v578
      %v615 = vunpack.c.l.b16 %v579
      %v616 = vunpack.c.l.b16 %v580
      %v617 = vunpack.c.l.b16 %v581
      %v618 = vunpack.c.l.b16 %v582
      %v619 = vunpack.c.l.b16 %v583
      %v620 = vunpack.c.l.b16 %v584
      %v621 = vunpack.c.l.b16 %v585
      %v622 = vunpack.c.l.b16 %v586
      %v623 = vunpack.c.l.b16 %v587
      %v624 = vunpack.c.l.b16 %v588
      %v625 = vunpack.c.l.b16 %v589
      %v626 = vunpack.c.l.b16 %v590
      %v627 = vpack.c.b16 %v612, %v611
      %v628 = vpack.c.b16 %v614, %v613
      %v629 = vpack.c.b16 %v616, %v615
      %v630 = vpack.c.b16 %v618, %v617
      %v631 = vpack.c.b16 %v620, %v619
      %v632 = vpack.c.b16 %v622, %v621
      %v633 = vpack.c.b16 %v624, %v623
      %v634 = vpack.c.b16 %v626, %v625
      %643 = vmatprep.subr.bf16.mxu0 0
      %644 = vmatpush1.bf16.msra.mxu0 %v634
      %645 = vmatprep.subr.bf16.mxu0 0
      %646 = vmatpush1.bf16.msra.mxu0 %v633
      %647 = vmatprep.subr.bf16.mxu0 0
      %648 = vmatpush1.bf16.msra.mxu0 %v632
      %649 = vmatprep.subr.bf16.mxu0 0
      %650 = vmatpush1.bf16.msra.mxu0 %v631
      %651 = vmatprep.subr.bf16.mxu0 0
      %652 = vmatpush1.bf16.msra.mxu0 %v630
      %653 = vmatprep.subr.bf16.mxu0 0
      %654 = vmatpush1.bf16.msra.mxu0 %v629
      %655 = vmatprep.subr.bf16.mxu0 0
      %656 = vmatpush1.bf16.msra.mxu0 %v628
      %657 = vmatprep.subr.bf16.mxu0 0
      %658 = vmatpush1.bf16.msra.mxu0 %v627
      %659 = vmatprep.subr.bf16.mxu0 0
      %660 = vmatpush2.bf16.msra.mxu0 0
      %661 = vmatprep.subr.bf16.mxu0 0
      %662 = vmatpush2.bf16.msra.mxu0 0
      %663 = vmatprep.subr.bf16.mxu0 0
      %664 = vmatpush2.bf16.msra.mxu0 0
      %665 = vmatprep.subr.bf16.mxu0 0
      %666 = vmatpush2.bf16.msra.mxu0 0
      %667 = vmatprep.subr.bf16.mxu0 0
      %668 = vmatpush2.bf16.msra.mxu0 0
      %669 = vmatprep.subr.bf16.mxu0 0
      %670 = vmatpush2.bf16.msra.mxu0 0
      %671 = vmatprep.subr.bf16.mxu0 0
      %672 = vmatpush2.bf16.msra.mxu0 0
      %673 = vmatprep.subr.bf16.mxu0 0
      %674 = vmatpush2.bf16.msra.mxu0 0
      %675 = vmatprep.mubr.bf16.mxu0 0
      %676 = vmatmul.mubr.bf16.gmra.mxu0 %v566
      %v677 = vpop.f32.mrf.mxu0
      %v678 = vadd.f32 %v594, %v677
      %v679 = vpop.f32.mrf.mxu0
      %v680 = vpop.f32.mrf.mxu0
      %v681 = vadd.f32 %v594, %v680
      %v682 = vpop.f32.mrf.mxu0
      %683 = vmatprep.mubr.bf16.mxu0 0
      %684 = vmatmul.mubr.bf16.gmra.mxu0 %v567
      %v685 = vpop.f32.mrf.mxu0
      %v686 = vadd.f32 %v594, %v685
      %v687 = vpop.f32.mrf.mxu0
      %v688 = vpop.f32.mrf.mxu0
      %v689 = vadd.f32 %v594, %v688
      %v690 = vpop.f32.mrf.mxu0
      %691 = vmatprep.mubr.bf16.mxu0 0
      %692 = vmatmul.mubr.bf16.gmra.mxu0 %v568
      %v693 = vpop.f32.mrf.mxu0
      %v694 = vadd.f32 %v594, %v693
      %v695 = vpop.f32.mrf.mxu0
      %v696 = vpop.f32.mrf.mxu0
      %v697 = vadd.f32 %v594, %v696
      %v698 = vpop.f32.mrf.mxu0
      %699 = vmatprep.mubr.bf16.mxu0 0
      %700 = vmatmul.mubr.bf16.gmra.mxu0 %v569
      %v701 = vpop.f32.mrf.mxu0
      %v702 = vadd.f32 %v594, %v701
      %v703 = vpop.f32.mrf.mxu0
      %v704 = vpop.f32.mrf.mxu0
      %v705 = vadd.f32 %v594, %v704
      %v706 = vpop.f32.mrf.mxu0
      %707 = vmatprep.mubr.bf16.mxu0 0
      %708 = vmatmul.mubr.bf16.gmra.mxu0 %v570
      %v709 = vpop.f32.mrf.mxu0
      %v710 = vadd.f32 %v594, %v709
      %v711 = vpop.f32.mrf.mxu0
      %v712 = vpop.f32.mrf.mxu0
      %v713 = vadd.f32 %v594, %v712
      %v714 = vpop.f32.mrf.mxu0
      %715 = vmatprep.mubr.bf16.mxu0 0
      %716 = vmatmul.mubr.bf16.gmra.mxu0 %v571
      %v717 = vpop.f32.mrf.mxu0
      %v718 = vadd.f32 %v594, %v717
      %v719 = vpop.f32.mrf.mxu0
      %v720 = vpop.f32.mrf.mxu0
      %v721 = vadd.f32 %v594, %v720
      %v722 = vpop.f32.mrf.mxu0
      %723 = vmatprep.mubr.bf16.mxu0 0
      %724 = vmatmul.mubr.bf16.gmra.mxu0 %v572
      %v725 = vpop.f32.mrf.mxu0
      %v726 = vadd.f32 %v594, %v725
      %v727 = vpop.f32.mrf.mxu0
      %v728 = vpop.f32.mrf.mxu0
      %v729 = vadd.f32 %v594, %v728
      %v730 = vpop.f32.mrf.mxu0
      %731 = vmatprep.mubr.bf16.mxu0 0
      %732 = vmatmul.mubr.bf16.gmra.mxu0 %v573
      %v733 = vpop.f32.mrf.mxu0
      %v734 = vadd.f32 %v594, %v733
      %v735 = vpop.f32.mrf.mxu0
      %v736 = vpop.f32.mrf.mxu0
      %v737 = vadd.f32 %v594, %v736
      %v738 = vpop.f32.mrf.mxu0
      %739 = vdwg.mxu0
      %v740 = vlaneseq
      %v741 = vand.u32 %v740, 127
      %vm742 = vcmp.lt.s32.totalorder %v741, 8
      %v743 = vsel %vm742, %v678, -inf
      %v744 = vsel %vm742, %v681, -inf
      %v745 = vsel %vm742, %v686, -inf
      %v746 = vsel %vm742, %v689, -inf
      %v747 = vsel %vm742, %v694, -inf
      %v748 = vsel %vm742, %v697, -inf
      %v749 = vsel %vm742, %v702, -inf
      %v750 = vsel %vm742, %v705, -inf
      %v751 = vsel %vm742, %v710, -inf
      %v752 = vsel %vm742, %v713, -inf
      %v753 = vsel %vm742, %v718, -inf
      %v754 = vsel %vm742, %v721, -inf
      %v755 = vsel %vm742, %v726, -inf
      %v756 = vsel %vm742, %v729, -inf
      %v757 = vsel %vm742, %v734, -inf
      %v758 = vsel %vm742, %v737, -inf
      %759 = vmax.xlane.f32.xlu0 %v743
      %v760 = vpop.xlane.xlu0 %759
      %761 = vmax.xlane.f32.xlu0 %v744
      %v762 = vpop.xlane.xlu0 %761
      %763 = vmax.xlane.f32.xlu0 %v745
      %v764 = vpop.xlane.xlu0 %763
      %765 = vmax.xlane.f32.xlu0 %v746
      %v766 = vpop.xlane.xlu0 %765
      %767 = vmax.xlane.f32.xlu0 %v747
      %v768 = vpop.xlane.xlu0 %767
      %769 = vmax.xlane.f32.xlu0 %v748
      %v770 = vpop.xlane.xlu0 %769
      %771 = vmax.xlane.f32.xlu0 %v749
      %v772 = vpop.xlane.xlu0 %771
      %773 = vmax.xlane.f32.xlu0 %v750
      %v774 = vpop.xlane.xlu0 %773
      %775 = vmax.xlane.f32.xlu0 %v751
      %v776 = vpop.xlane.xlu0 %775
      %777 = vmax.xlane.f32.xlu0 %v752
      %v778 = vpop.xlane.xlu0 %777
      %779 = vmax.xlane.f32.xlu0 %v753
      %v780 = vpop.xlane.xlu0 %779
      %781 = vmax.xlane.f32.xlu0 %v754
      %v782 = vpop.xlane.xlu0 %781
      %783 = vmax.xlane.f32.xlu0 %v755
      %v784 = vpop.xlane.xlu0 %783
      %785 = vmax.xlane.f32.xlu0 %v756
      %v786 = vpop.xlane.xlu0 %785
      %787 = vmax.xlane.f32.xlu0 %v757
      %v788 = vpop.xlane.xlu0 %787
      %789 = vmax.xlane.f32.xlu0 %v758
      %v790 = vpop.xlane.xlu0 %789
      %v791 = vsub.f32 %v743, %v760
      %v792 = vsub.f32 %v744, %v762
      %v793 = vsub.f32 %v745, %v764
      %v794 = vsub.f32 %v746, %v766
      %v795 = vsub.f32 %v747, %v768
      %v796 = vsub.f32 %v748, %v770
      %v797 = vsub.f32 %v749, %v772
      %v798 = vsub.f32 %v750, %v774
      %v799 = vsub.f32 %v751, %v776
      %v800 = vsub.f32 %v752, %v778
      %v801 = vsub.f32 %v753, %v780
      %v802 = vsub.f32 %v754, %v782
      %v803 = vsub.f32 %v755, %v784
      %v804 = vsub.f32 %v756, %v786
      %v805 = vsub.f32 %v757, %v788
      %v806 = vsub.f32 %v758, %v790
      %v807 = vmul.f32 %v791, 1.442695
      %v808 = vpow.pop %v807
      %v809 = vmul.f32 %v792, 1.442695
      %v810 = vpow.pop %v809
      %v811 = vmul.f32 %v793, 1.442695
      %v812 = vpow.pop %v811
      %v813 = vmul.f32 %v794, 1.442695
      %v814 = vpow.pop %v813
      %v815 = vmul.f32 %v795, 1.442695
      %v816 = vpow.pop %v815
      %v817 = vmul.f32 %v796, 1.442695
      %v818 = vpow.pop %v817
      %v819 = vmul.f32 %v797, 1.442695
      %v820 = vpow.pop %v819
      %v821 = vmul.f32 %v798, 1.442695
      %v822 = vpow.pop %v821
      %v823 = vmul.f32 %v799, 1.442695
      %v824 = vpow.pop %v823
      %v825 = vmul.f32 %v800, 1.442695
      %v826 = vpow.pop %v825
      %v827 = vmul.f32 %v801, 1.442695
      %v828 = vpow.pop %v827
      %v829 = vmul.f32 %v802, 1.442695
      %v830 = vpow.pop %v829
      %v831 = vmul.f32 %v803, 1.442695
      %v832 = vpow.pop %v831
      %v833 = vmul.f32 %v804, 1.442695
      %v834 = vpow.pop %v833
      %v835 = vmul.f32 %v805, 1.442695
      %v836 = vpow.pop %v835
      %v837 = vmul.f32 %v806, 1.442695
      %v838 = vpow.pop %v837
      %839 = vadd.xlane.f32.xlu0 %v808
      %v840 = vpop.xlane.xlu0 %839
      %841 = vadd.xlane.f32.xlu0 %v810
      %v842 = vpop.xlane.xlu0 %841
      %843 = vadd.xlane.f32.xlu0 %v812
      %v844 = vpop.xlane.xlu0 %843
      %845 = vadd.xlane.f32.xlu0 %v814
      %v846 = vpop.xlane.xlu0 %845
      %847 = vadd.xlane.f32.xlu0 %v816
      %v848 = vpop.xlane.xlu0 %847
      %849 = vadd.xlane.f32.xlu0 %v818
      %v850 = vpop.xlane.xlu0 %849
      %851 = vadd.xlane.f32.xlu0 %v820
      %v852 = vpop.xlane.xlu0 %851
      %853 = vadd.xlane.f32.xlu0 %v822
      %v854 = vpop.xlane.xlu0 %853
      %855 = vadd.xlane.f32.xlu0 %v824
      %v856 = vpop.xlane.xlu0 %855
      %857 = vadd.xlane.f32.xlu0 %v826
      %v858 = vpop.xlane.xlu0 %857
      %859 = vadd.xlane.f32.xlu0 %v828
      %v860 = vpop.xlane.xlu0 %859
      %861 = vadd.xlane.f32.xlu0 %v830
      %v862 = vpop.xlane.xlu0 %861
      %863 = vadd.xlane.f32.xlu0 %v832
      %v864 = vpop.xlane.xlu0 %863
      %865 = vadd.xlane.f32.xlu0 %v834
      %v866 = vpop.xlane.xlu0 %865
      %867 = vadd.xlane.f32.xlu0 %v836
      %v868 = vpop.xlane.xlu0 %867
      %869 = vadd.xlane.f32.xlu0 %v838
      %v870 = vpop.xlane.xlu0 %869
      %v871 = vrcp.pop %v840
      %v872 = vrcp.pop %v842
      %v873 = vrcp.pop %v844
      %v874 = vrcp.pop %v846
      %v875 = vrcp.pop %v848
      %v876 = vrcp.pop %v850
      %v877 = vrcp.pop %v852
      %v878 = vrcp.pop %v854
      %v879 = vrcp.pop %v856
      %v880 = vrcp.pop %v858
      %v881 = vrcp.pop %v860
      %v882 = vrcp.pop %v862
      %v883 = vrcp.pop %v864
      %v884 = vrcp.pop %v866
      %v885 = vrcp.pop %v868
      %v886 = vrcp.pop %v870
      %v887 = vmul.f32 %v840, %v871
      %v888 = vmul.f32 %v842, %v872
      %v889 = vmul.f32 %v844, %v873
      %v890 = vmul.f32 %v846, %v874
      %v891 = vmul.f32 %v848, %v875
      %v892 = vmul.f32 %v850, %v876
      %v893 = vmul.f32 %v852, %v877
      %v894 = vmul.f32 %v854, %v878
      %v895 = vmul.f32 %v856, %v879
      %v896 = vmul.f32 %v858, %v880
      %v897 = vmul.f32 %v860, %v881
      %v898 = vmul.f32 %v862, %v882
      %v899 = vmul.f32 %v864, %v883
      %v900 = vmul.f32 %v866, %v884
      %v901 = vmul.f32 %v868, %v885
      %v902 = vmul.f32 %v870, %v886
      %v903 = vsub.f32 2.0, %v887
      %v904 = vsub.f32 2.0, %v888
      %v905 = vsub.f32 2.0, %v889
      %v906 = vsub.f32 2.0, %v890
      %v907 = vsub.f32 2.0, %v891
      %v908 = vsub.f32 2.0, %v892
      %v909 = vsub.f32 2.0, %v893
      %v910 = vsub.f32 2.0, %v894
      %v911 = vsub.f32 2.0, %v895
      %v912 = vsub.f32 2.0, %v896
      %v913 = vsub.f32 2.0, %v897
      %v914 = vsub.f32 2.0, %v898
      %v915 = vsub.f32 2.0, %v899
      %v916 = vsub.f32 2.0, %v900
      %v917 = vsub.f32 2.0, %v901
      %v918 = vsub.f32 2.0, %v902
      %v919 = vmul.f32 %v871, %v903
      %v920 = vmul.f32 %v872, %v904
      %v921 = vmul.f32 %v873, %v905
      %v922 = vmul.f32 %v874, %v906
      %v923 = vmul.f32 %v875, %v907
      %v924 = vmul.f32 %v876, %v908
      %v925 = vmul.f32 %v877, %v909
      %v926 = vmul.f32 %v878, %v910
      %v927 = vmul.f32 %v879, %v911
      %v928 = vmul.f32 %v880, %v912
      %v929 = vmul.f32 %v881, %v913
      %v930 = vmul.f32 %v882, %v914
      %v931 = vmul.f32 %v883, %v915
      %v932 = vmul.f32 %v884, %v916
      %v933 = vmul.f32 %v885, %v917
      %v934 = vmul.f32 %v886, %v918
      %v935 = vmul.f32 %v808, %v919
      %v936 = vmul.f32 %v810, %v920
      %v937 = vmul.f32 %v812, %v921
      %v938 = vmul.f32 %v814, %v922
      %v939 = vmul.f32 %v816, %v923
      %v940 = vmul.f32 %v818, %v924
      %v941 = vmul.f32 %v820, %v925
      %v942 = vmul.f32 %v822, %v926
      %v943 = vmul.f32 %v824, %v927
      %v944 = vmul.f32 %v826, %v928
      %v945 = vmul.f32 %v828, %v929
      %v946 = vmul.f32 %v830, %v930
      %v947 = vmul.f32 %v832, %v931
      %v948 = vmul.f32 %v834, %v932
      %v949 = vmul.f32 %v836, %v933
      %v950 = vmul.f32 %v838, %v934
      %vm951 = vcmp.eq.s32.totalorder %v741, 8
      %v952 = vsel %vm951, %v678, %v935
      %v953 = vsel %vm951, %v681, %v936
      %v954 = vsel %vm951, %v686, %v937
      %v955 = vsel %vm951, %v689, %v938
      %v956 = vsel %vm951, %v694, %v939
      %v957 = vsel %vm951, %v697, %v940
      %v958 = vsel %vm951, %v702, %v941
      %v959 = vsel %vm951, %v705, %v942
      %v960 = vsel %vm951, %v710, %v943
      %v961 = vsel %vm951, %v713, %v944
      %v962 = vsel %vm951, %v718, %v945
      %v963 = vsel %vm951, %v721, %v946
      %v964 = vsel %vm951, %v726, %v947
      %v965 = vsel %vm951, %v729, %v948
      %v966 = vsel %vm951, %v734, %v949
      %v967 = vsel %vm951, %v737, %v950
      %968 = vst.msk [vmem:[%s199] sm:$0xff] %vm239, %v952
      %969 = vst.msk [vmem:[%s199 + $0x8] sm:$0xff] %vm239, %v953
      %970 = vst.msk [vmem:[%s199 + $0x10] sm:$0xff] %vm239, %v954
      %971 = vst.msk [vmem:[%s199 + $0x18] sm:$0xff] %vm239, %v955
      %972 = vst.msk [vmem:[%s199 + $0x20] sm:$0xff] %vm239, %v956
      %973 = vst.msk [vmem:[%s199 + $0x28] sm:$0xff] %vm239, %v957
      %974 = vst.msk [vmem:[%s199 + $0x30] sm:$0xff] %vm239, %v958
      %975 = vst.msk [vmem:[%s199 + $0x38] sm:$0xff] %vm239, %v959
      %976 = vst.msk [vmem:[%s199 + $0x40] sm:$0xff] %vm239, %v960
      %977 = vst.msk [vmem:[%s199 + $0x48] sm:$0xff] %vm239, %v961
      %978 = vst.msk [vmem:[%s199 + $0x50] sm:$0xff] %vm239, %v962
      %979 = vst.msk [vmem:[%s199 + $0x58] sm:$0xff] %vm239, %v963
      %980 = vst.msk [vmem:[%s199 + $0x60] sm:$0xff] %vm239, %v964
      %981 = vst.msk [vmem:[%s199 + $0x68] sm:$0xff] %vm239, %v965
      %982 = vst.msk [vmem:[%s199 + $0x70] sm:$0xff] %vm239, %v966
      %983 = vst.msk [vmem:[%s199 + $0x78] sm:$0xff] %vm239, %v967
      %s984 = smul.u32 16, %s15
      %p985 = scmp.lt.s32.totalorder %s984, 31
      %s986 = scalar_select %p985, %s984, 31
      %s987 = smul.addr %s986, 8
      %s988 = scalar_lea.vmem %s4, %s987
      // Predicated region
      $region37: #{ppo_forward.1} parent=35 // pred_check
        %p989 = pneg %p122
      $region38: #{ppo_forward.1} parent=35 // pred_check_branch
        %991 = sbr.rel (%p989) target = $region40
      $region39: #{ppo_forward.1} parent=35 // pred_region
        %s992 = smul.u32 16, %s15
      $region40: #{ppo_forward.1} parent=35 // pred_fallthru
        _
    $region36: #{ppo_forward.1} parent=5 // pred_fallthru
      _
    %p993 = scmp.le.s32.totalorder 2, %s10
    // Predicated region
    $region41: #{ppo_forward.1} parent=5 // pred_check
      %p994 = pneg %p993
    $region42: #{ppo_forward.1} parent=5 // pred_check_branch
      %996 = sbr.rel (%p994) target = $region44
    $region43: #{ppo_forward.1} parent=5 // pred_region
      %s997 = ssub.s32 %s10, 2
      // Predicated region
      $region45: #{ppo_forward.1} parent=43 // pred_check
        %p998 = pneg %p128
      $region46: #{ppo_forward.1} parent=43 // pred_check_branch
        %1000 = sbr.rel (%p998) target = $region48
      $region47: #{ppo_forward.1} parent=43 // pred_region
        %s1001 = smul.u32 16, %s16
        %p1002 = scmp.lt.s32.totalorder %s1001, 31
        %s1003 = scalar_select %p1002, %s1001, 31
        %s1004 = smul.addr %s1003, 8
        %s1005 = scalar_lea.vmem %s4, %s1004
      $region48: #{ppo_forward.1} parent=43 // pred_fallthru
        _
    $region44: #{ppo_forward.1} parent=5 // pred_fallthru
      _
  $region6: #{ppo_forward.1} parent=0 // loop_footer
    %s14 = sadd.s32 1, %s10
  $region7: #{ppo_forward.1} parent=0 // loop_footer_branch
    %9 = sbr.rel target = $region3
  $region8: #{ppo_forward.1} parent=0 // loop_exit
    _

</llo_original>
